<compile_context>
chip_gen: v6e
topology: v6e:2x2x1
jax: 0.10.0
libtpu: 0.0.40
codegen_flags: <defaults>
</compile_context>

<pallas_src>
import functools

import jax
import jax.numpy as jnp
from jax.experimental import pallas as pl
from jax.experimental.pallas import tpu as pltpu


_LANE = 128
# Budget (bytes) for the double-buffered (tm, K) + (K, tn) stripes that decides
# whether the single-K-step fast path is used.
_SINGLE_K_STRIPE_BYTES = 24 << 20
# Cap for vmem_limit_bytes: leaves headroom under v7x's 64 MiB physical VMEM.
_VMEM_LIMIT_CAP = 48 << 20


def _round_up(x: int, m: int) -> int:
    return ((x + m - 1) // m) * m


def _pick_tile(dim: int, unit: int, max_tile: int):
    """Pick (tile, padded_dim): pad only to `unit` alignment when possible and
    choose a tile that divides the aligned dim; fall back to padding to a
    multiple of max_tile only for pathological (e.g. prime) dims."""
    aligned = _round_up(dim, unit)
    if aligned <= max_tile:
        return aligned, aligned
    n_units = aligned // unit
    max_units = max(1, max_tile // unit)
    best = 1
    for d in range(1, max_units + 1):
        if n_units % d == 0:
            best = d
    tile = best * unit
    if tile * 4 >= max_tile:  # acceptable divisor tile -> zero extra padding
        return tile, aligned
    return max_tile, _round_up(aligned, max_tile)


def _linear_kernel_multi_k(x_ref, w_ref, b_ref, o_ref, acc_ref):
    """3D grid (i, j, k): resident f32 accumulator across the K axis."""
    k = pl.program_id(2)

    @pl.when(k == 0)
    def _init():
        # Fold the bias into the accumulator init (epilogue becomes a pure store).
        acc_ref[...] = jnp.broadcast_to(
            b_ref[...].astype(jnp.float32), acc_ref.shape
        )

    acc_ref[...] += jnp.dot(
        x_ref[...], w_ref[...], preferred_element_type=jnp.float32
    )

    @pl.when(k == pl.num_programs(2) - 1)
    def _store():
        o_ref[...] = acc_ref[...].astype(o_ref.dtype)


def _linear_kernel_single_k(x_ref, w_ref, b_ref, o_ref):
    """2D grid (i, j): whole K stripe in VMEM, single matmul, no scratch."""
    acc = jnp.dot(x_ref[...], w_ref[...], preferred_element_type=jnp.float32)
    o_ref[...] = (acc + b_ref[...].astype(jnp.float32)).astype(o_ref.dtype)


@functools.partial(jax.jit, static_argnames=("tm", "tn", "tk"))
def my_linear(
    x: jax.Array,
    W: jax.Array,
    b: jax.Array,
    *,
    tm: int = 512,
    tn: int = 512,
    tk: int = 1024,
) -> jax.Array:
    M, K = x.shape
    Kw, N = W.shape
    assert K == Kw, (K, Kw)
    assert b.shape == (N,), b.shape

    itemsize = x.dtype.itemsize
    out_dtype = x.dtype
    out_itemsize = jnp.dtype(out_dtype).itemsize
    # Dtype-aware sublane alignment (f32: 8, bf16: 16, int8/fp8: 32).
    sublane = {4: 8, 2: 16, 1: 32}.get(itemsize, 8)

    # Pick tiles as divisors of the alignment-padded dims (minimal padding).
    tm, Mp = _pick_tile(M, sublane, tm)
    tn, Np = _pick_tile(N, _LANE, tn)

    Kp_aligned = _round_up(K, _LANE)
    single_k = (
        2 * Kp_aligned * (tm + tn) * itemsize <= _SINGLE_K_STRIPE_BYTES
    )
    if single_k:
        tk, Kp = Kp_aligned, Kp_aligned
    else:
        tk, Kp = _pick_tile(K, _LANE, tk)
        single_k = Kp == tk

    # Pad only where needed (static shapes -> these are compile-time branches).
    xp = x if (Mp, Kp) == (M, K) else jnp.pad(x, ((0, Mp - M), (0, Kp - K)))
    Wp = W if (Kp, Np) == (K, N) else jnp.pad(W, ((0, Kp - K), (0, Np - N)))
    bp = (b if Np == N else jnp.pad(b, (0, Np - N))).reshape(1, Np)

    n_i, n_j, n_k = Mp // tm, Np // tn, Kp // tk

    # Truthful traffic estimate: x re-read per j block, W re-read per i block.
    cost = pl.CostEstimate(
        flops=2 * Mp * Kp * Np,
        transcendentals=0,
        bytes_accessed=(
            (Mp * Kp * n_j + Kp * Np * n_i + Np) * itemsize
            + Mp * Np * out_itemsize
        ),
    )

    # VMEM budget: double-buffered input/output tiles (+ f32 accumulator on the
    # multi-K path), with margin; explicit so v5e's 16 MiB default is lifted and
    # v7x's 64 MiB physical VMEM is respected.
    tile_bytes = (
        2 * (tm * tk + tk * tn) * itemsize
        + 2 * tm * tn * out_itemsize
        + 2 * tn * itemsize
        + (0 if single_k else tm * tn * 4)
    )
    vmem_limit = min(
        max(int(tile_bytes * 1.25) + (4 << 20), 24 << 20), _VMEM_LIMIT_CAP
    )

    if single_k:
        out_padded = pl.pallas_call(
            _linear_kernel_single_k,
            out_shape=jax.ShapeDtypeStruct((Mp, Np), out_dtype),
            grid_spec=pltpu.PrefetchScalarGridSpec(
                num_scalar_prefetch=0,
                grid=(n_i, n_j),
                in_specs=[
                    pl.BlockSpec((tm, Kp), lambda i, j: (i, 0)),
                    pl.BlockSpec((Kp, tn), lambda i, j: (0, j)),
                    pl.BlockSpec((1, tn), lambda i, j: (0, j)),
                ],
                out_specs=pl.BlockSpec((tm, tn), lambda i, j: (i, j)),
            ),
            compiler_params=pltpu.CompilerParams(
                dimension_semantics=("parallel", "parallel"),
                vmem_limit_bytes=vmem_limit,
            ),
            cost_estimate=cost,
        )(xp, Wp, bp)
    else:
        out_padded = pl.pallas_call(
            _linear_kernel_multi_k,
            out_shape=jax.ShapeDtypeStruct((Mp, Np), out_dtype),
            grid_spec=pltpu.PrefetchScalarGridSpec(
                num_scalar_prefetch=0,
                grid=(n_i, n_j, n_k),
                in_specs=[
                    pl.BlockSpec((tm, tk), lambda i, j, k: (i, k)),
                    pl.BlockSpec((tk, tn), lambda i, j, k: (k, j)),
                    pl.BlockSpec((1, tn), lambda i, j, k: (0, j)),
                ],
                out_specs=pl.BlockSpec((tm, tn), lambda i, j, k: (i, j)),
                scratch_shapes=[pltpu.VMEM((tm, tn), jnp.float32)],
            ),
            compiler_params=pltpu.CompilerParams(
                dimension_semantics=("parallel", "parallel", "arbitrary"),
                vmem_limit_bytes=vmem_limit,
            ),
            cost_estimate=cost,
        )(xp, Wp, bp)

    if (Mp, Np) == (M, N):
        return out_padded
    return out_padded[:M, :N]


if __name__ == "__main__":
    # --- Exact values from the PyTorch spec (MyLinear, input_dim=3, output_dim=2) ---
    x = jnp.array([[1, 1, 1], [2, 2, 2], [3, 3, 3], [4, 4, 4]], dtype=jnp.float32)
    W = jnp.array([[1, 2], [3, 4], [5, 6]], dtype=jnp.float32)
    b = jnp.array([2, 2], dtype=jnp.float32)

    y = my_linear(x, W, b)
    jax.block_until_ready(y)
    y_ref = x @ W + b
    assert y.shape == (4, 2), y.shape
    assert jnp.allclose(y, y_ref, atol=1e-5), (y, y_ref)

    # --- Ragged shapes: exercises alignment-only padding + single-K fast path. ---
    key = jax.random.PRNGKey(0)
    kx, kw, kb = jax.random.split(key, 3)
    M2, K2, N2 = 300, 700, 260
    x2 = jax.random.normal(kx, (M2, K2), dtype=jnp.float32)
    W2 = jax.random.normal(kw, (K2, N2), dtype=jnp.float32)
    b2 = jax.random.normal(kb, (N2,), dtype=jnp.float32)

    y2 = my_linear(x2, W2, b2)
    jax.block_until_ready(y2)
    y2_ref = x2 @ W2 + b2
    assert y2.shape == (M2, N2), y2.shape
    assert jnp.allclose(y2, y2_ref, atol=1e-3, rtol=1e-4), (
        jnp.max(jnp.abs(y2 - y2_ref))
    )

    # --- Larger case: exercises the 3D multi-K path (resident accumulator,
    #     bias folded into the k==0 init, multi-block M grid). ---
    kx3, kw3, kb3 = jax.random.split(jax.random.PRNGKey(1), 3)
    M3, K3, N3 = 1024, 4096, 512
    x3 = jax.random.normal(kx3, (M3, K3), dtype=jnp.float32)
    W3 = jax.random.normal(kw3, (K3, N3), dtype=jnp.float32)
    b3 = jax.random.normal(kb3, (N3,), dtype=jnp.float32)

    y3 = my_linear(x3, W3, b3)
    jax.block_until_ready(y3)
    y3_ref = x3 @ W3 + b3
    assert y3.shape == (M3, N3), y3.shape
    assert jnp.allclose(y3, y3_ref, atol=5e-2, rtol=1e-4), (
        jnp.max(jnp.abs(y3 - y3_ref))
    )

    print("KERNEL_OK")
</pallas_src>

<mosaic_0001>
module attributes {stable_mosaic.version = 11 : i64} {
  func.func @_linear_kernel_single_k(%arg0: i32, %arg1: i32, %arg2: memref<8x128xf32, #tpu.memory_space<vmem>>, %arg3: memref<128x128xf32, #tpu.memory_space<vmem>>, %arg4: memref<1x128xf32, #tpu.memory_space<vmem>>, %arg5: memref<8x128xf32, #tpu.memory_space<vmem>>) attributes {dimension_semantics = [#tpu.dimension_semantics<parallel>, #tpu.dimension_semantics<parallel>], iteration_bounds = array<i64: 1, 1>, scalar_prefetch = 0 : i64, scratch_operands = 0 : i64, tpu.core_type = #tpu.core_type<tc>, window_params = [{transform_indices = @transform_0, window_bounds = array<i64: 8, 128>}, {transform_indices = @transform_1, window_bounds = array<i64: 128, 128>}, {transform_indices = @transform_2, window_bounds = array<i64: 1, 128>}, {transform_indices = @transform_3, window_bounds = array<i64: 8, 128>}]} {
    %c0 = arith.constant 0 : index
    %c0_0 = arith.constant 0 : index
    %0 = vector.load %arg2[%c0, %c0_0] : memref<8x128xf32, #tpu.memory_space<vmem>>, vector<8x128xf32>
    %c0_1 = arith.constant 0 : index
    %c0_2 = arith.constant 0 : index
    %1 = vector.load %arg3[%c0_1, %c0_2] : memref<128x128xf32, #tpu.memory_space<vmem>>, vector<128x128xf32>
    %cst = arith.constant dense<0.000000e+00> : vector<8x128xf32>
    %2 = tpu.matmul %0, %1, %cst {dimension_numbers = #tpu.dot_dimension_numbers<[1], [0], [0], [1], [0, 0, 1, 1], [], []>} : vector<8x128xf32>, vector<128x128xf32>, vector<8x128xf32> -> vector<8x128xf32>
    %c0_3 = arith.constant 0 : index
    %c0_4 = arith.constant 0 : index
    %3 = vector.load %arg4[%c0_3, %c0_4] : memref<1x128xf32, #tpu.memory_space<vmem>>, vector<1x128xf32>
    %4 = vector.broadcast %3 : vector<1x128xf32> to vector<8x128xf32>
    %5 = arith.addf %2, %4 : vector<8x128xf32>
    %c0_5 = arith.constant 0 : index
    %c0_6 = arith.constant 0 : index
    %6 = vector.load %arg5[%c0_5, %c0_6] : memref<8x128xf32, #tpu.memory_space<vmem>>, vector<8x128xf32>
    tpu.vector_store %arg5[%c0_5, %c0_6], %5 {strides = array<i32>} : memref<8x128xf32, #tpu.memory_space<vmem>>, vector<8x128xf32>,
    return
  }
  func.func @transform_0(%arg0: i32, %arg1: i32) -> (i32, i32) {
    %c0_i32 = arith.constant 0 : i32
    %c0_i32_0 = arith.constant 0 : i32
    return %arg0, %c0_i32 : i32, i32
  }
  func.func @transform_1(%arg0: i32, %arg1: i32) -> (i32, i32) {
    %c0_i32 = arith.constant 0 : i32
    %c0_i32_0 = arith.constant 0 : i32
    return %c0_i32, %arg1 : i32, i32
  }
  func.func @transform_2(%arg0: i32, %arg1: i32) -> (i32, i32) {
    %c0_i32 = arith.constant 0 : i32
    %c0_i32_0 = arith.constant 0 : i32
    return %c0_i32, %arg1 : i32, i32
  }
  func.func @transform_3(%arg0: i32, %arg1: i32) -> (i32, i32) {
    %c0_i32 = arith.constant 0 : i32
    return %arg0, %arg1 : i32, i32
  }
}

</mosaic_0001>

<llo_original>
// kernel: my_linear.1
$region0: #{my_linear.1}
  #allocation0 [shape = 'u32[]', space=smem, size = 0x4, offset = 0x4, fixed_abs, tag = 'smem constant byte address 0x4 - core index']
  #allocation1 [shape = 'u32[144,128]{1,0:T(1,128)}', space=vmem, size = 0x12000, scoped, tag = 'internal scratch']
  %s0 = inlined_call_operand.vmem [shape: f32[8,128], index: 0, kind: input, shape index: {}]
  %s1 = inlined_call_operand.vmem [shape: f32[128,128], index: 1, kind: input, shape index: {}]
  %s2 = inlined_call_operand.vmem [shape: f32[1,128], index: 2, kind: input, shape index: {}]
  %s3 = inlined_call_operand.vmem [shape: f32[8,128], index: 3, kind: output, shape index: {}]
  %s4 = sld [smem:[#allocation0]]
  $region22: #{my_linear.1} parent=0
    _
  %s6 = ssub.s32 1, %s4
  %s7 = scalar_select 0, %s6, %s4
  // Predicated region
  $region2: #{my_linear.1} parent=0 // pred_check
    _
  $region3: #{my_linear.1} parent=0 // pred_check_branch
    %9 = sbr.rel (0) target = $region5
  $region4: #{my_linear.1} parent=0 // pred_region
    _
  $region5: #{my_linear.1} parent=0 // pred_fallthru
    _
  // Predicated region
  $region6: #{my_linear.1} parent=0 // pred_check
    _
  $region7: #{my_linear.1} parent=0 // pred_check_branch
    %11 = sbr.rel (0) target = $region9
  $region8: #{my_linear.1} parent=0 // pred_region
    _
  $region9: #{my_linear.1} parent=0 // pred_fallthru
    _
  // Predicated region
  $region10: #{my_linear.1} parent=0 // pred_check
    _
  $region11: #{my_linear.1} parent=0 // pred_check_branch
    %13 = sbr.rel (0) target = $region13
  $region12: #{my_linear.1} parent=0 // pred_region
    _
  $region13: #{my_linear.1} parent=0 // pred_fallthru
    _
  %v14 = vld [vmem:[%s0] sm:$0xff]
  %v15 = vld [vmem:[%s1] sm:$0xff]
  %v16 = vld [vmem:[%s1 + $0x8] sm:$0xff]
  %v17 = vld [vmem:[%s1 + $0x10] sm:$0xff]
  %v18 = vld [vmem:[%s1 + $0x18] sm:$0xff]
  %v19 = vld [vmem:[%s1 + $0x20] sm:$0xff]
  %v20 = vld [vmem:[%s1 + $0x28] sm:$0xff]
  %v21 = vld [vmem:[%s1 + $0x30] sm:$0xff]
  %v22 = vld [vmem:[%s1 + $0x38] sm:$0xff]
  %v23 = vld [vmem:[%s1 + $0x40] sm:$0xff]
  %v24 = vld [vmem:[%s1 + $0x48] sm:$0xff]
  %v25 = vld [vmem:[%s1 + $0x50] sm:$0xff]
  %v26 = vld [vmem:[%s1 + $0x58] sm:$0xff]
  %v27 = vld [vmem:[%s1 + $0x60] sm:$0xff]
  %v28 = vld [vmem:[%s1 + $0x68] sm:$0xff]
  %v29 = vld [vmem:[%s1 + $0x70] sm:$0xff]
  %v30 = vld [vmem:[%s1 + $0x78] sm:$0xff]
  %v31 = vld [vmem:[%s2] sm:$0x1]
  %v33 = vlaneseq
  %v34 = vshrl.u32 %v33, 7
  %v35 = vsub.s32 0, %v34
  %v36 = vrot.slane %v31, %v35
  %38 = vmatprep.subr.mxu0 0.0
  %39 = vmatpush1.msra.mxu0 %v30
  %40 = vmatprep.subr.mxu0 0.0
  %41 = vmatpush1.msra.mxu0 %v29
  %42 = vmatprep.subr.mxu0 0.0
  %43 = vmatpush1.msra.mxu0 %v28
  %44 = vmatprep.subr.mxu0 0.0
  %45 = vmatpush1.msra.mxu0 %v27
  %46 = vmatprep.subr.mxu0 0.0
  %47 = vmatpush1.msra.mxu0 %v26
  %48 = vmatprep.subr.mxu0 0.0
  %49 = vmatpush1.msra.mxu0 %v25
  %50 = vmatprep.subr.mxu0 0.0
  %51 = vmatpush1.msra.mxu0 %v24
  %52 = vmatprep.subr.mxu0 0.0
  %53 = vmatpush1.msra.mxu0 %v23
  %54 = vmatprep.subr.mxu0 0.0
  %55 = vmatpush1.msra.mxu0 %v22
  %56 = vmatprep.subr.mxu0 0.0
  %57 = vmatpush1.msra.mxu0 %v21
  %58 = vmatprep.subr.mxu0 0.0
  %59 = vmatpush1.msra.mxu0 %v20
  %60 = vmatprep.subr.mxu0 0.0
  %61 = vmatpush1.msra.mxu0 %v19
  %62 = vmatprep.subr.mxu0 0.0
  %63 = vmatpush1.msra.mxu0 %v18
  %64 = vmatprep.subr.mxu0 0.0
  %65 = vmatpush1.msra.mxu0 %v17
  %66 = vmatprep.subr.mxu0 0.0
  %67 = vmatpush1.msra.mxu0 %v16
  %68 = vmatprep.subr.mxu0 0.0
  %69 = vmatpush1.msra.mxu0 %v15
  %70 = vmatprep.subr.mxu0 0.0
  %71 = vmatpush2.msra.mxu0 0.0
  %72 = vmatprep.subr.mxu0 0.0
  %73 = vmatpush2.msra.mxu0 0.0
  %74 = vmatprep.subr.mxu0 0.0
  %75 = vmatpush2.msra.mxu0 0.0
  %76 = vmatprep.subr.mxu0 0.0
  %77 = vmatpush2.msra.mxu0 0.0
  %78 = vmatprep.subr.mxu0 0.0
  %79 = vmatpush2.msra.mxu0 0.0
  %80 = vmatprep.subr.mxu0 0.0
  %81 = vmatpush2.msra.mxu0 0.0
  %82 = vmatprep.subr.mxu0 0.0
  %83 = vmatpush2.msra.mxu0 0.0
  %84 = vmatprep.subr.mxu0 0.0
  %85 = vmatpush2.msra.mxu0 0.0
  %86 = vmatprep.subr.mxu0 0.0
  %87 = vmatpush2.msra.mxu0 0.0
  %88 = vmatprep.subr.mxu0 0.0
  %89 = vmatpush2.msra.mxu0 0.0
  %90 = vmatprep.subr.mxu0 0.0
  %91 = vmatpush2.msra.mxu0 0.0
  %92 = vmatprep.subr.mxu0 0.0
  %93 = vmatpush2.msra.mxu0 0.0
  %94 = vmatprep.subr.mxu0 0.0
  %95 = vmatpush2.msra.mxu0 0.0
  %96 = vmatprep.subr.mxu0 0.0
  %97 = vmatpush2.msra.mxu0 0.0
  %98 = vmatprep.subr.mxu0 0.0
  %99 = vmatpush2.msra.mxu0 0.0
  %100 = vmatprep.subr.mxu0 0.0
  %101 = vmatpush2.msra.mxu0 0.0
  %102 = vmatprep.mubr.f32.mxu0 0.0
  %103 = vmatmul.mubr.f32.gmra.mxu0 %v14
  %v104 = vpop.f32.mrf.mxu0
  %v105 = vadd.f32 %v36, %v104
  %v106 = vpop.f32.mrf.mxu0
  %107 = vdwg.mxu0
  %108 = vst [vmem:[%s3] sm:$0xff] %v105
  // Predicated region
  $region14: #{my_linear.1} parent=0 // pred_check
    _
  $region15: #{my_linear.1} parent=0 // pred_check_branch
    %110 = sbr.rel (0) target = $region17
  $region16: #{my_linear.1} parent=0 // pred_region
    _
  $region17: #{my_linear.1} parent=0 // pred_fallthru
    _
  // Predicated region
  $region18: #{my_linear.1} parent=0 // pred_check
    _
  $region19: #{my_linear.1} parent=0 // pred_check_branch
    %112 = sbr.rel (0) target = $region21
  $region20: #{my_linear.1} parent=0 // pred_region
    _
  $region21: #{my_linear.1} parent=0 // pred_fallthru
    _

</llo_original>
